<compile_context>
chip_gen: v6e
topology: v6e:2x2x1
jax: 0.10.0
libtpu: 0.0.40
codegen_flags: <defaults>
</compile_context>

<pallas_src>
import math
import functools

import jax
import jax.numpy as jnp
from jax.experimental import pallas as pl
from jax.experimental.pallas import tpu as pltpu


# ----------------------------- in-kernel helpers -----------------------------
def _silu(x):
    # x * sigmoid(x); the reciprocal runs on the EUP (approx) instead of a VPU divide.
    return x * pl.reciprocal(1.0 + jnp.exp(-x), approx=True)


def _softplus(x):
    # numerically stable softplus
    return jnp.maximum(x, 0.0) + jnp.log1p(jnp.exp(-jnp.abs(x)))


# ---------------------------------- kernel -----------------------------------
def flow_decoder_kernel(bbox_ref, flow_ref, hs_ref,
                        w_er_ref, b_er_ref, w_flow_ref, b_dt_ref,
                        w_A_ref, w_E_ref, d_ref,
                        w_out_full_ref, w_out_nar_ref, out_b_ref,
                        out_ref, hs_out_ref, *, d_inner, DN):
    f32 = jnp.float32
    bbox = bbox_ref[...]                        # (TB, 8)   contraction dim padded 4 -> 8
    flow = flow_ref[...]                        # (TB, d_m)
    hs = hs_ref[...].astype(f32)                # (TB, DN)  lane-dense state (f32/bf16 in HBM)

    # ---- narrow projections + nonlinearities (one lane-tile wide) ----
    # in_proj as a single MXU matmul; silu applied to both the e and r halves.
    er = _silu(jnp.dot(bbox, w_er_ref[...], preferred_element_type=f32) + b_er_ref[...])
    e_n = er[:, :d_inner]                       # silu(e_i)          (TB, d_inner)
    sr_n = er[:, d_inner:]                      # silu(r_i)          (TB, d_inner)

    # flow_proj (+ dt_proj weight) fused into one matmul: [B tiled | C tiled | dt narrow].
    # Slice offsets (0, DN, 2*DN) are all 128-lane aligned -> views, no relayout.
    fbig = jnp.dot(flow, w_flow_ref[...], preferred_element_type=f32)    # (TB, 2*DN + d_inner)
    B_tile = fbig[:, :DN]
    C_tile = fbig[:, DN:2 * DN]
    dt_n = _softplus(fbig[:, 2 * DN:] + b_dt_ref[...])                   # (TB, d_inner)

    u_n = dt_n * e_n                            # dt * silu(e)              (narrow)
    den_n = d_ref[...] * e_n * sr_n             # D * silu(e) * silu(r)     (narrow)

    # ---- expand narrow quantities to DN on the MXU (A folded into w_A) ----
    dA = jnp.exp(jnp.dot(dt_n, w_A_ref[...], preferred_element_type=f32))   # exp(dt*A)  (TB, DN)
    u_flat = jnp.dot(u_n, w_E_ref[...], preferred_element_type=f32)         # (TB, DN)
    sr_flat = jnp.dot(sr_n, w_E_ref[...], preferred_element_type=f32)       # (TB, DN)

    # ---- SSM single-step state update, fully lane-dense ----
    hs_new = hs * dA + u_flat * B_tile
    hs_out_ref[...] = hs_new.astype(hs_out_ref.dtype)

    # ---- y = (sum_n hs_new*C + D*e) * silu(r), folded with out_proj on the MXU ----
    term = hs_new * C_tile * sr_flat
    out_ref[...] = (jnp.dot(term, w_out_full_ref[...], preferred_element_type=f32)
                    + jnp.dot(den_n, w_out_nar_ref[...], preferred_element_type=f32)
                    + out_b_ref[...])           # (TB, 4)


# --------------------------- parameter packing --------------------------------
def _pack_params(params, d_inner, d_state, dt_rank):
    """Fold all slicing / fusion / expansion into the weights (done once, tiny)."""
    DN = d_inner * d_state
    f32 = jnp.float32

    # E[d, d*N + n] = 1 : expand a per-d_inner value across its d_state lanes.
    E = jnp.repeat(jnp.eye(d_inner, dtype=f32), d_state, axis=1)          # (d_inner, DN)
    # T[n, d*N + n] = 1 : tile a per-d_state value across the d_inner groups.
    T = jnp.tile(jnp.eye(d_state, dtype=f32), (1, d_inner))               # (d_state, DN)

    in_w, in_b = params["in_w"], params["in_b"]                           # (4, 2*di), (1, 2*di)
    flow_w = params["flow_w"]                                             # (d_m, dt_rank + 2*ds)
    fw_dt = flow_w[:, :dt_rank]
    fw_B = flow_w[:, dt_rank:dt_rank + d_state]
    fw_C = flow_w[:, dt_rank + d_state:dt_rank + 2 * d_state]

    A_flat = (-jnp.exp(params["A_log"])).reshape(1, DN)

    return dict(
        # bbox in_proj: single matmul, contraction dim zero-padded 4 -> 8 sublanes.
        w_er=jnp.pad(in_w, ((0, 8 - in_w.shape[0]), (0, 0))),             # (8, 2*d_inner)
        b_er=in_b,                                                        # (1, 2*d_inner)
        # flow_proj + dt_proj fused: [B@T | C@T | fw_dt@dt_w].
        w_flow=jnp.concatenate(
            [fw_B @ T, fw_C @ T, fw_dt @ params["dt_w"]], axis=1),        # (d_m, 2*DN + d_inner)
        b_dt=params["dt_b"],                                              # (1, d_inner)
        # Expansion matrices used on the MXU after the narrow nonlinearities.
        w_A=E * A_flat,                                                   # (d_inner, DN): dt -> dt*A
        w_E=E,                                                            # (d_inner, DN)
        d_vec=params["D"],                                                # (1, d_inner)
        # d_state reduction fused with out_proj; plus the narrow D-path weight.
        w_out_full=E.T @ params["out_w"],                                 # (DN, 4)
        w_out_nar=params["out_w"],                                        # (d_inner, 4)
        out_b=params["out_b"],                                            # (1, 4)
    )


# -------------------------------- tiling --------------------------------------
def _round_up(x, m):
    return (x + m - 1) // m * m


def _choose_tile(bs, batch_tile, sub, min_steps=2):
    """Pick (batch_tile, padded_batch).

    Preference:
      1. a tile that divides bs exactly (no pad / [:bs] round trip of the big
         state tensor) and gives >= min_steps grid steps (v7x has two
         TensorCores) without exploding the step count (~0.35us/step overhead),
      2. otherwise the smallest padding that still gives >= min_steps steps.
    """
    cap = max(sub, min(_round_up(batch_tile, sub), _round_up(bs, sub)))
    max_steps = max(min_steps, 8 * (-(-bs // cap)))
    if bs % sub == 0:
        for t in range(cap, 0, -sub):
            if bs % t == 0 and min_steps <= bs // t <= max_steps:
                return t, bs
        if bs <= cap:                      # too small to be worth splitting
            return bs, bs
    steps = max(min_steps if bs > sub else 1, -(-bs // cap))
    t = min(cap, _round_up(-(-bs // steps), sub))
    return t, _round_up(bs, t)


# -------------------------------- wrapper --------------------------------------
def flow_decoder_forward(bbox, hidden_state, flow_embed, params,
                         d_inner, d_state, dt_rank, *,
                         batch_tile=1024, state_dtype=jnp.float32):
    """FlowDecoderLayer forward (default / slow path).

    state_dtype=jnp.bfloat16 stores the SSM state (the dominant HBM traffic)
    in bf16 while keeping all in-kernel math in f32 (recommended on v5e/v6e).
    """
    bs = bbox.shape[0]
    d_m = flow_embed.shape[1]
    DN = d_inner * d_state
    state_dtype = jnp.dtype(state_dtype)

    packed = _pack_params(params, d_inner, d_state, dt_rank)

    # sub-lane granularity of the batch tile: 8 for f32 state, 16 for bf16.
    sub = 16 if state_dtype.itemsize < 4 else 8
    TB, bs_pad = _choose_tile(bs, batch_tile, sub)
    pad = bs_pad - bs

    # bbox is tiny (16 B/row); also pad its contraction dim 4 -> 8 for the MXU.
    bbox_p = jnp.pad(bbox.astype(jnp.float32), ((0, pad), (0, 8 - bbox.shape[1])))
    flow_p = flow_embed.astype(jnp.float32)
    hs_p = hidden_state.reshape(bs, DN).astype(state_dtype)   # lane-dense flattened state
    if pad:
        # _choose_tile avoids this path whenever an exact-divisor tile exists,
        # since padding/slicing the state costs an extra HBM round trip.
        flow_p = jnp.pad(flow_p, ((0, pad), (0, 0)))
        hs_p = jnp.pad(hs_p, ((0, pad), (0, 0)))

    grid = (bs_pad // TB,)

    def row_spec(width):
        return pl.BlockSpec((TB, width), lambda i: (i, 0))

    def weight_spec(arr):
        # constant index_map -> weight block stays VMEM-resident across the grid
        return pl.BlockSpec(arr.shape, lambda i: (0, 0))

    weight_names = ["w_er", "b_er", "w_flow", "b_dt", "w_A", "w_E", "d_vec",
                    "w_out_full", "w_out_nar", "out_b"]
    weights = [packed[n] for n in weight_names]

    in_specs = ([row_spec(8), row_spec(d_m), row_spec(DN)]
                + [weight_spec(w) for w in weights])
    out_specs = (row_spec(4), row_spec(DN))

    # Explicit VMEM budget: double-buffered I/O blocks + a generous allowance
    # for f32 intermediates, capped at v7x's 64 MiB physical VMEM.
    weight_bytes = sum(int(w.size) * w.dtype.itemsize for w in weights)
    row_bytes = 2 * ((8 + d_m + 4) * 4 + 2 * DN * state_dtype.itemsize) + 12 * DN * 4
    vmem_limit = int(min(max(2 * weight_bytes + TB * row_bytes + (2 << 20), 32 << 20),
                         64 << 20))

    kernel = functools.partial(flow_decoder_kernel, d_inner=d_inner, DN=DN)

    out, hs_new_flat = pl.pallas_call(
        kernel,
        grid=grid,
        in_specs=in_specs,
        out_specs=out_specs,
        out_shape=(
            jax.ShapeDtypeStruct((bs_pad, 4), jnp.float32),
            jax.ShapeDtypeStruct((bs_pad, DN), state_dtype),
        ),
        compiler_params=pltpu.CompilerParams(
            dimension_semantics=("parallel",),
            vmem_limit_bytes=vmem_limit,
        ),
    )(bbox_p, flow_p, hs_p, *weights)

    if pad:
        out = out[:bs]
        hs_new_flat = hs_new_flat[:bs]
    hs_new = hs_new_flat.reshape(bs, d_inner, d_state)
    return out, hs_new


# --------------------------- pure-JAX reference --------------------------------
def flow_decoder_reference(bbox, hidden_state, flow_embed, params,
                           d_inner, d_state, dt_rank):
    bbox_hdim = bbox @ params["in_w"] + params["in_b"]
    e_i, r_i = bbox_hdim[:, :d_inner], bbox_hdim[:, d_inner:]
    e_i = jax.nn.silu(e_i)
    A = -jnp.exp(params["A_log"])
    proj_f = flow_embed @ params["flow_w"]
    dt = proj_f[:, :dt_rank]
    B = proj_f[:, dt_rank:dt_rank + d_state]
    C = proj_f[:, dt_rank + d_state:]
    dt = dt @ params["dt_w"]
    dt = jax.nn.softplus(dt + params["dt_b"])
    dA = jnp.exp(jnp.einsum("bd,dn->bdn", dt, A))
    dB = jnp.einsum("bd,bn->bdn", dt, B)
    hs_new = hidden_state * dA + e_i[:, :, None] * dB
    y = jnp.einsum("bdn,bn->bd", hs_new, C)
    y = y + params["D"] * e_i
    y = y * jax.nn.silu(r_i)
    out = y @ params["out_w"] + params["out_b"]
    return out, hs_new


# --------------------------------- params --------------------------------------
def make_params(key, d_m, d_inner, d_state, dt_rank):
    ks = jax.random.split(key, 8)

    def uni(k, shape, bound):
        return jax.random.uniform(k, shape, jnp.float32, -bound, bound)

    # in_proj: Linear(4 -> 2*d_inner)
    in_w = uni(ks[0], (4, 2 * d_inner), 1.0 / math.sqrt(4))
    in_b = uni(ks[1], (1, 2 * d_inner), 1.0 / math.sqrt(4))

    # flow_proj: Linear(d_m -> dt_rank + 2*d_state), no bias
    flow_w = uni(ks[2], (d_m, dt_rank + 2 * d_state), 1.0 / math.sqrt(d_m))

    # dt_proj: Linear(dt_rank -> d_inner), uniform(-dt_rank^-0.5, dt_rank^-0.5)
    dt_init_std = dt_rank ** (-0.5)
    dt_w = uni(ks[3], (dt_rank, d_inner), dt_init_std)
    dt_min, dt_max, dt_init_floor = 0.001, 0.1, 1e-4
    u = jax.random.uniform(ks[4], (d_inner,), jnp.float32)
    dt = jnp.exp(u * (math.log(dt_max) - math.log(dt_min)) + math.log(dt_min))
    dt = jnp.clip(dt, dt_init_floor, None)
    inv_dt = dt + jnp.log(-jnp.expm1(-dt))
    dt_b = inv_dt.reshape(1, d_inner)

    # A_log = log(repeat(arange(1, d_state+1), 'n -> d n'))
    A = jnp.broadcast_to(jnp.arange(1, d_state + 1, dtype=jnp.float32),
                         (d_inner, d_state))
    A_log = jnp.log(A)

    D = jnp.ones((1, d_inner), jnp.float32)

    # out_proj: Linear(d_inner -> 4)
    out_w = uni(ks[5], (d_inner, 4), 1.0 / math.sqrt(d_inner))
    out_b = uni(ks[6], (1, 4), 1.0 / math.sqrt(d_inner))

    return dict(in_w=in_w, in_b=in_b, flow_w=flow_w, dt_w=dt_w, dt_b=dt_b,
                A_log=A_log, D=D, out_w=out_w, out_b=out_b)


# ---------------------------------- main ----------------------------------------
if __name__ == "__main__":
    # small config: d_m=32, d_d=16 -> d_inner=32, d_state=8, dt_rank='auto'->2
    d_m, d_d, d_state = 32, 16, 8
    d_inner = 2 * d_d
    dt_rank = math.ceil(d_m / 16)

    key = jax.random.PRNGKey(0)
    k_param, k_data = jax.random.split(key)
    params = make_params(k_param, d_m, d_inner, d_state, dt_rank)

    cases = [
        # (bs, batch_tile, state_dtype, tol)
        (8,  512, jnp.float32,  5e-3),   # single grid step
        (40, 16,  jnp.float32,  5e-3),   # multi-step, exact-divisor tile (no pad)
        (44, 24,  jnp.float32,  5e-3),   # ragged batch -> tiny-padding fallback
        (64, 512, jnp.bfloat16, 5e-2),   # bf16 state storage (HBM saver, f32 math)
    ]
    for bs, tile, sdtype, tol in cases:
        kb, kh, kf = jax.random.split(jax.random.fold_in(k_data, bs), 3)
        bbox = jax.random.normal(kb, (bs, 4), jnp.float32)
        hidden_state = jax.random.normal(kh, (bs, d_inner, d_state), jnp.float32)
        flow_embed = jax.random.normal(kf, (bs, d_m), jnp.float32)

        out, hs_new = flow_decoder_forward(bbox, hidden_state, flow_embed, params,
                                           d_inner, d_state, dt_rank,
                                           batch_tile=tile, state_dtype=sdtype)
        jax.block_until_ready((out, hs_new))

        ref_out, ref_hs = flow_decoder_reference(bbox, hidden_state, flow_embed,
                                                 params, d_inner, d_state, dt_rank)
        assert out.shape == (bs, 4) and hs_new.shape == (bs, d_inner, d_state)
        hs_f32 = hs_new.astype(jnp.float32)
        assert jnp.allclose(out, ref_out, atol=tol, rtol=tol), \
            f"out mismatch (bs={bs}, {sdtype}): {jnp.max(jnp.abs(out - ref_out))}"
        assert jnp.allclose(hs_f32, ref_hs, atol=tol, rtol=tol), \
            f"hidden_state mismatch (bs={bs}, {sdtype}): {jnp.max(jnp.abs(hs_f32 - ref_hs))}"

    print("KERNEL_OK")
</pallas_src>

<mosaic_0001>
module attributes {stable_mosaic.version = 11 : i64} {
  func.func @flow_decoder_kernel(%arg0: i32, %arg1: memref<8x8xf32, #tpu.memory_space<vmem>>, %arg2: memref<8x32xf32, #tpu.memory_space<vmem>>, %arg3: memref<8x256xf32, #tpu.memory_space<vmem>>, %arg4: memref<8x64xf32, #tpu.memory_space<vmem>>, %arg5: memref<1x64xf32, #tpu.memory_space<vmem>>, %arg6: memref<32x544xf32, #tpu.memory_space<vmem>>, %arg7: memref<1x32xf32, #tpu.memory_space<vmem>>, %arg8: memref<32x256xf32, #tpu.memory_space<vmem>>, %arg9: memref<32x256xf32, #tpu.memory_space<vmem>>, %arg10: memref<1x32xf32, #tpu.memory_space<vmem>>, %arg11: memref<256x4xf32, #tpu.memory_space<vmem>>, %arg12: memref<32x4xf32, #tpu.memory_space<vmem>>, %arg13: memref<1x4xf32, #tpu.memory_space<vmem>>, %arg14: memref<8x4xf32, #tpu.memory_space<vmem>>, %arg15: memref<8x256xf32, #tpu.memory_space<vmem>>) attributes {dimension_semantics = [#tpu.dimension_semantics<parallel>], iteration_bounds = array<i64: 1>, scalar_prefetch = 0 : i64, scratch_operands = 0 : i64, tpu.core_type = #tpu.core_type<tc>, window_params = [{transform_indices = @transform_0, window_bounds = array<i64: 8, 8>}, {transform_indices = @transform_1, window_bounds = array<i64: 8, 32>}, {transform_indices = @transform_2, window_bounds = array<i64: 8, 256>}, {pipeline_mode = #tpu.pipeline_mode<synchronous>, transform_indices = @transform_3, window_bounds = array<i64: 8, 64>}, {pipeline_mode = #tpu.pipeline_mode<synchronous>, transform_indices = @transform_4, window_bounds = array<i64: 1, 64>}, {pipeline_mode = #tpu.pipeline_mode<synchronous>, transform_indices = @transform_5, window_bounds = array<i64: 32, 544>}, {pipeline_mode = #tpu.pipeline_mode<synchronous>, transform_indices = @transform_6, window_bounds = array<i64: 1, 32>}, {pipeline_mode = #tpu.pipeline_mode<synchronous>, transform_indices = @transform_7, window_bounds = array<i64: 32, 256>}, {pipeline_mode = #tpu.pipeline_mode<synchronous>, transform_indices = @transform_8, window_bounds = array<i64: 32, 256>}, {pipeline_mode = #tpu.pipeline_mode<synchronous>, transform_indices = @transform_9, window_bounds = array<i64: 1, 32>}, {pipeline_mode = #tpu.pipeline_mode<synchronous>, transform_indices = @transform_10, window_bounds = array<i64: 256, 4>}, {pipeline_mode = #tpu.pipeline_mode<synchronous>, transform_indices = @transform_11, window_bounds = array<i64: 32, 4>}, {pipeline_mode = #tpu.pipeline_mode<synchronous>, transform_indices = @transform_12, window_bounds = array<i64: 1, 4>}, {transform_indices = @transform_13, window_bounds = array<i64: 8, 4>}, {transform_indices = @transform_14, window_bounds = array<i64: 8, 256>}]} {
    %c0 = arith.constant 0 : index
    %c0_0 = arith.constant 0 : index
    %0 = vector.load %arg1[%c0, %c0_0] : memref<8x8xf32, #tpu.memory_space<vmem>>, vector<8x8xf32>
    %c0_1 = arith.constant 0 : index
    %c0_2 = arith.constant 0 : index
    %1 = vector.load %arg2[%c0_1, %c0_2] : memref<8x32xf32, #tpu.memory_space<vmem>>, vector<8x32xf32>
    %c0_3 = arith.constant 0 : index
    %c0_4 = arith.constant 0 : index
    %2 = vector.load %arg3[%c0_3, %c0_4] : memref<8x256xf32, #tpu.memory_space<vmem>>, vector<8x256xf32>
    %c0_5 = arith.constant 0 : index
    %c0_6 = arith.constant 0 : index
    %3 = vector.load %arg4[%c0_5, %c0_6] : memref<8x64xf32, #tpu.memory_space<vmem>>, vector<8x64xf32>
    %cst = arith.constant dense<0.000000e+00> : vector<8x64xf32>
    %4 = tpu.matmul %0, %3, %cst {dimension_numbers = #tpu.dot_dimension_numbers<[1], [0], [0], [1], [0, 0, 1, 1], [], []>} : vector<8x8xf32>, vector<8x64xf32>, vector<8x64xf32> -> vector<8x64xf32>
    %c0_7 = arith.constant 0 : index
    %c0_8 = arith.constant 0 : index
    %5 = vector.load %arg5[%c0_7, %c0_8] : memref<1x64xf32, #tpu.memory_space<vmem>>, vector<1x64xf32>
    %6 = vector.broadcast %5 : vector<1x64xf32> to vector<8x64xf32>
    %7 = arith.addf %4, %6 : vector<8x64xf32>
    %cst_9 = arith.constant 0.000000e+00 : f32
    %8 = vector.broadcast %cst_9 : f32 to vector<8x64xf32>
    %9 = arith.subf %8, %7 : vector<8x64xf32>
    %10 = math.exp %9 : vector<8x64xf32>
    %cst_10 = arith.constant 1.000000e+00 : f32
    %11 = vector.broadcast %cst_10 : f32 to vector<8x64xf32>
    %12 = arith.addf %11, %10 : vector<8x64xf32>
    %13 = tpu.reciprocal %12 {approx = true} : vector<8x64xf32> -> vector<8x64xf32>
    %14 = arith.mulf %7, %13 : vector<8x64xf32>
    %15 = vector.extract_strided_slice %14 {offsets = [0, 0], sizes = [8, 32], strides = [1, 1]} : vector<8x64xf32> to vector<8x32xf32>
    %16 = vector.extract_strided_slice %14 {offsets = [0, 32], sizes = [8, 32], strides = [1, 1]} : vector<8x64xf32> to vector<8x32xf32>
    %c0_11 = arith.constant 0 : index
    %c0_12 = arith.constant 0 : index
    %17 = vector.load %arg6[%c0_11, %c0_12] : memref<32x544xf32, #tpu.memory_space<vmem>>, vector<32x544xf32>
    %cst_13 = arith.constant dense<0.000000e+00> : vector<8x544xf32>
    %18 = tpu.matmul %1, %17, %cst_13 {dimension_numbers = #tpu.dot_dimension_numbers<[1], [0], [0], [1], [0, 0, 1, 1], [], []>} : vector<8x32xf32>, vector<32x544xf32>, vector<8x544xf32> -> vector<8x544xf32>
    %19 = vector.extract_strided_slice %18 {offsets = [0, 0], sizes = [8, 256], strides = [1, 1]} : vector<8x544xf32> to vector<8x256xf32>
    %20 = vector.extract_strided_slice %18 {offsets = [0, 256], sizes = [8, 256], strides = [1, 1]} : vector<8x544xf32> to vector<8x256xf32>
    %21 = vector.extract_strided_slice %18 {offsets = [0, 512], sizes = [8, 32], strides = [1, 1]} : vector<8x544xf32> to vector<8x32xf32>
    %c0_14 = arith.constant 0 : index
    %c0_15 = arith.constant 0 : index
    %22 = vector.load %arg7[%c0_14, %c0_15] : memref<1x32xf32, #tpu.memory_space<vmem>>, vector<1x32xf32>
    %23 = vector.broadcast %22 : vector<1x32xf32> to vector<8x32xf32>
    %24 = arith.addf %21, %23 : vector<8x32xf32>
    %cst_16 = arith.constant 0.000000e+00 : f32
    %25 = vector.broadcast %cst_16 : f32 to vector<8x32xf32>
    %26 = arith.maximumf %24, %25 : vector<8x32xf32>
    %27 = math.absf %24 : vector<8x32xf32>
    %cst_17 = arith.constant 0.000000e+00 : f32
    %28 = vector.broadcast %cst_17 : f32 to vector<8x32xf32>
    %29 = arith.subf %28, %27 : vector<8x32xf32>
    %30 = math.exp %29 : vector<8x32xf32>
    %31 = math.log1p %30 : vector<8x32xf32>
    %32 = arith.addf %26, %31 : vector<8x32xf32>
    %33 = arith.mulf %32, %15 : vector<8x32xf32>
    %c0_18 = arith.constant 0 : index
    %c0_19 = arith.constant 0 : index
    %34 = vector.load %arg10[%c0_18, %c0_19] : memref<1x32xf32, #tpu.memory_space<vmem>>, vector<1x32xf32>
    %35 = vector.broadcast %34 : vector<1x32xf32> to vector<8x32xf32>
    %36 = arith.mulf %35, %15 : vector<8x32xf32>
    %37 = arith.mulf %36, %16 : vector<8x32xf32>
    %c0_20 = arith.constant 0 : index
    %c0_21 = arith.constant 0 : index
    %38 = vector.load %arg8[%c0_20, %c0_21] : memref<32x256xf32, #tpu.memory_space<vmem>>, vector<32x256xf32>
    %cst_22 = arith.constant dense<0.000000e+00> : vector<8x256xf32>
    %39 = tpu.matmul %32, %38, %cst_22 {dimension_numbers = #tpu.dot_dimension_numbers<[1], [0], [0], [1], [0, 0, 1, 1], [], []>} : vector<8x32xf32>, vector<32x256xf32>, vector<8x256xf32> -> vector<8x256xf32>
    %40 = math.exp %39 : vector<8x256xf32>
    %c0_23 = arith.constant 0 : index
    %c0_24 = arith.constant 0 : index
    %41 = vector.load %arg9[%c0_23, %c0_24] : memref<32x256xf32, #tpu.memory_space<vmem>>, vector<32x256xf32>
    %cst_25 = arith.constant dense<0.000000e+00> : vector<8x256xf32>
    %42 = tpu.matmul %33, %41, %cst_25 {dimension_numbers = #tpu.dot_dimension_numbers<[1], [0], [0], [1], [0, 0, 1, 1], [], []>} : vector<8x32xf32>, vector<32x256xf32>, vector<8x256xf32> -> vector<8x256xf32>
    %c0_26 = arith.constant 0 : index
    %c0_27 = arith.constant 0 : index
    %43 = vector.load %arg9[%c0_26, %c0_27] : memref<32x256xf32, #tpu.memory_space<vmem>>, vector<32x256xf32>
    %cst_28 = arith.constant dense<0.000000e+00> : vector<8x256xf32>
    %44 = tpu.matmul %16, %43, %cst_28 {dimension_numbers = #tpu.dot_dimension_numbers<[1], [0], [0], [1], [0, 0, 1, 1], [], []>} : vector<8x32xf32>, vector<32x256xf32>, vector<8x256xf32> -> vector<8x256xf32>
    %45 = arith.mulf %2, %40 : vector<8x256xf32>
    %46 = arith.mulf %42, %19 : vector<8x256xf32>
    %47 = arith.addf %45, %46 : vector<8x256xf32>
    %c0_29 = arith.constant 0 : index
    %c0_30 = arith.constant 0 : index
    %48 = vector.load %arg15[%c0_29, %c0_30] : memref<8x256xf32, #tpu.memory_space<vmem>>, vector<8x256xf32>
    tpu.vector_store %arg15[%c0_29, %c0_30], %47 {strides = array<i32>} : memref<8x256xf32, #tpu.memory_space<vmem>>, vector<8x256xf32>,
    %49 = arith.mulf %47, %20 : vector<8x256xf32>
    %50 = arith.mulf %49, %44 : vector<8x256xf32>
    %c0_31 = arith.constant 0 : index
    %c0_32 = arith.constant 0 : index
    %51 = vector.load %arg11[%c0_31, %c0_32] : memref<256x4xf32, #tpu.memory_space<vmem>>, vector<256x4xf32>
    %cst_33 = arith.constant dense<0.000000e+00> : vector<8x4xf32>
    %52 = tpu.matmul %50, %51, %cst_33 {dimension_numbers = #tpu.dot_dimension_numbers<[1], [0], [0], [1], [0, 0, 1, 1], [], []>} : vector<8x256xf32>, vector<256x4xf32>, vector<8x4xf32> -> vector<8x4xf32>
    %c0_34 = arith.constant 0 : index
    %c0_35 = arith.constant 0 : index
    %53 = vector.load %arg12[%c0_34, %c0_35] : memref<32x4xf32, #tpu.memory_space<vmem>>, vector<32x4xf32>
    %cst_36 = arith.constant dense<0.000000e+00> : vector<8x4xf32>
    %54 = tpu.matmul %37, %53, %cst_36 {dimension_numbers = #tpu.dot_dimension_numbers<[1], [0], [0], [1], [0, 0, 1, 1], [], []>} : vector<8x32xf32>, vector<32x4xf32>, vector<8x4xf32> -> vector<8x4xf32>
    %55 = arith.addf %52, %54 : vector<8x4xf32>
    %c0_37 = arith.constant 0 : index
    %c0_38 = arith.constant 0 : index
    %56 = vector.load %arg13[%c0_37, %c0_38] : memref<1x4xf32, #tpu.memory_space<vmem>>, vector<1x4xf32>
    %57 = vector.broadcast %56 : vector<1x4xf32> to vector<8x4xf32>
    %58 = arith.addf %55, %57 : vector<8x4xf32>
    %c0_39 = arith.constant 0 : index
    %c0_40 = arith.constant 0 : index
    %59 = vector.load %arg14[%c0_39, %c0_40] : memref<8x4xf32, #tpu.memory_space<vmem>>, vector<8x4xf32>
    tpu.vector_store %arg14[%c0_39, %c0_40], %58 {strides = array<i32>} : memref<8x4xf32, #tpu.memory_space<vmem>>, vector<8x4xf32>,
    return
  }
  func.func @transform_0(%arg0: i32) -> (i32, i32) {
    %c0_i32 = arith.constant 0 : i32
    %c0_i32_0 = arith.constant 0 : i32
    return %arg0, %c0_i32 : i32, i32
  }
  func.func @transform_1(%arg0: i32) -> (i32, i32) {
    %c0_i32 = arith.constant 0 : i32
    %c0_i32_0 = arith.constant 0 : i32
    return %arg0, %c0_i32 : i32, i32
  }
  func.func @transform_2(%arg0: i32) -> (i32, i32) {
    %c0_i32 = arith.constant 0 : i32
    %c0_i32_0 = arith.constant 0 : i32
    return %arg0, %c0_i32 : i32, i32
  }
  func.func @transform_3(%arg0: i32) -> (i32, i32) {
    %c0_i32 = arith.constant 0 : i32
    %c0_i32_0 = arith.constant 0 : i32
    %c0_i32_1 = arith.constant 0 : i32
    return %c0_i32, %c0_i32_0 : i32, i32
  }
  func.func @transform_4(%arg0: i32) -> (i32, i32) {
    %c0_i32 = arith.constant 0 : i32
    %c0_i32_0 = arith.constant 0 : i32
    %c0_i32_1 = arith.constant 0 : i32
    return %c0_i32, %c0_i32_0 : i32, i32
  }
  func.func @transform_5(%arg0: i32) -> (i32, i32) {
    %c0_i32 = arith.constant 0 : i32
    %c0_i32_0 = arith.constant 0 : i32
    %c0_i32_1 = arith.constant 0 : i32
    return %c0_i32, %c0_i32_0 : i32, i32
  }
  func.func @transform_6(%arg0: i32) -> (i32, i32) {
    %c0_i32 = arith.constant 0 : i32
    %c0_i32_0 = arith.constant 0 : i32
    %c0_i32_1 = arith.constant 0 : i32
    return %c0_i32, %c0_i32_0 : i32, i32
  }
  func.func @transform_7(%arg0: i32) -> (i32, i32) {
    %c0_i32 = arith.constant 0 : i32
    %c0_i32_0 = arith.constant 0 : i32
    %c0_i32_1 = arith.constant 0 : i32
    return %c0_i32, %c0_i32_0 : i32, i32
  }
  func.func @transform_8(%arg0: i32) -> (i32, i32) {
    %c0_i32 = arith.constant 0 : i32
    %c0_i32_0 = arith.constant 0 : i32
    %c0_i32_1 = arith.constant 0 : i32
    return %c0_i32, %c0_i32_0 : i32, i32
  }
  func.func @transform_9(%arg0: i32) -> (i32, i32) {
    %c0_i32 = arith.constant 0 : i32
    %c0_i32_0 = arith.constant 0 : i32
    %c0_i32_1 = arith.constant 0 : i32
    return %c0_i32, %c0_i32_0 : i32, i32
  }
  func.func @transform_10(%arg0: i32) -> (i32, i32) {
    %c0_i32 = arith.constant 0 : i32
    %c0_i32_0 = arith.constant 0 : i32
    %c0_i32_1 = arith.constant 0 : i32
    return %c0_i32, %c0_i32_0 : i32, i32
  }
  func.func @transform_11(%arg0: i32) -> (i32, i32) {
    %c0_i32 = arith.constant 0 : i32
    %c0_i32_0 = arith.constant 0 : i32
    %c0_i32_1 = arith.constant 0 : i32
    return %c0_i32, %c0_i32_0 : i32, i32
  }
  func.func @transform_12(%arg0: i32) -> (i32, i32) {
    %c0_i32 = arith.constant 0 : i32
    %c0_i32_0 = arith.constant 0 : i32
    %c0_i32_1 = arith.constant 0 : i32
    return %c0_i32, %c0_i32_0 : i32, i32
  }
  func.func @transform_13(%arg0: i32) -> (i32, i32) {
    %c0_i32 = arith.constant 0 : i32
    %c0_i32_0 = arith.constant 0 : i32
    return %arg0, %c0_i32 : i32, i32
  }
  func.func @transform_14(%arg0: i32) -> (i32, i32) {
    %c0_i32 = arith.constant 0 : i32
    %c0_i32_0 = arith.constant 0 : i32
    return %arg0, %c0_i32 : i32, i32
  }
}

</mosaic_0001>

<llo_original>
// kernel: tpu_custom_call.1
$region0: #{tpu_custom_call.1}
  #allocation0 [shape = 'u32[]', space=smem, size = 0x4, offset = 0x4, fixed_abs, tag = 'smem constant byte address 0x4 - core index']
  #allocation1 [shape = 'u32[144,128]{1,0:T(1,128)}', space=vmem, size = 0x12000, scoped, tag = 'internal scratch']
  %s0 = inlined_call_operand.hbm [shape: f32[8,8], index: 0, kind: input, shape index: {}]
  %s1 = inlined_call_operand.hbm [shape: f32[8,32], index: 1, kind: input, shape index: {}]
  %s2 = inlined_call_operand.vmem [shape: f32[8,256], index: 2, kind: input, shape index: {}]
  %s3 = inlined_call_operand.hbm [shape: f32[8,64], index: 3, kind: input, shape index: {}]
  %s4 = inlined_call_operand.hbm [shape: f32[1,64], index: 4, kind: input, shape index: {}]
  %s5 = inlined_call_operand.vmem [shape: f32[32,544], index: 5, kind: input, shape index: {}]
  %s6 = inlined_call_operand.hbm [shape: f32[1,32], index: 6, kind: input, shape index: {}]
  %s7 = inlined_call_operand.vmem [shape: f32[32,256], index: 7, kind: input, shape index: {}]
  %s8 = inlined_call_operand.vmem [shape: f32[32,256], index: 8, kind: input, shape index: {}]
  %s9 = inlined_call_operand.hbm [shape: f32[1,32], index: 9, kind: input, shape index: {}]
  %s10 = inlined_call_operand.vmem [shape: f32[256,4], index: 10, kind: input, shape index: {}]
  %s11 = inlined_call_operand.vmem [shape: f32[32,4], index: 11, kind: input, shape index: {}]
  %s12 = inlined_call_operand.vmem [shape: f32[1,4], index: 12, kind: input, shape index: {}]
  %s13 = inlined_call_operand.vmem [shape: f32[8,4], index: 13, kind: output, shape index: {0}]
  %s14 = inlined_call_operand.hbm [shape: f32[8,256], index: 14, kind: output, shape index: {1}]
  %15 = xla_tuple %s13, %s14
  %s16 = sld [smem:[#allocation0]]
  $region94: #{tpu_custom_call.1} parent=0
    _
  %s18 = ssub.s32 1, %s16
  %s19 = scalar_select 0, %s18, %s16
  $region1: #{tpu_custom_call.1} parent=0
    #allocation2 [shape = 'u8[4096]{0}', space=vmem, size = 0x1000, scoped, tag = 'input window, operand 0, single buffered']
    #allocation3 [shape = 's32[1]{0}', space=sflag, size = 0x4, scoped, tag = 'scoped memory for tpu_custom_call.1']
    #allocation4 [shape = 's32[1]{0}', space=sflag, size = 0x4, scoped, tag = 'scoped memory for tpu_custom_call.1']
    #allocation5 [shape = 'u8[4096]{0}', space=vmem, size = 0x1000, scoped, tag = 'input window, operand 1, single buffered']
    #allocation6 [shape = 's32[1]{0}', space=sflag, size = 0x4, scoped, tag = 'scoped memory for tpu_custom_call.1']
    #allocation7 [shape = 'u8[4096]{0}', space=vmem, size = 0x1000, scoped, tag = 'input window, operand 3, single buffered']
    #allocation8 [shape = 'u8[512]{0}', space=vmem, size = 0x400, scoped, tag = 'input window, operand 4, single buffered']
    #allocation9 [shape = 's32[1]{0}', space=sflag, size = 0x4, scoped, tag = 'scoped memory for tpu_custom_call.1']
    #allocation10 [shape = 'u8[512]{0}', space=vmem, size = 0x400, scoped, tag = 'input window, operand 6, single buffered']
    #allocation11 [shape = 'u8[512]{0}', space=vmem, size = 0x400, scoped, tag = 'input window, operand 9, single buffered']
    #allocation12 [shape = 's32[1]{0}', space=sflag, size = 0x4, scoped, tag = 'scoped memory for tpu_custom_call.1']
    #allocation13 [shape = 'u8[8192]{0}', space=vmem, size = 0x2000, scoped, tag = 'output window, operand 1, single buffered']
    %20 = vsyncpa [#allocation3], 0
    %21 = vsyncpa [#allocation6], 0
    %22 = vsyncpa [#allocation9], 0
    %23 = vsyncpa [#allocation12], 0
    %24 = vsyncpa [#allocation4], 0
    // Predicated region
    $region2: #{tpu_custom_call.1} parent=1 // pred_check
      _
    $region3: #{tpu_custom_call.1} parent=1 // pred_check_branch
      %26 = sbr.rel (0) target = $region5
    $region4: #{tpu_custom_call.1} parent=1 // pred_region
      %s28 = ssub.s32 128, 128
      %29 = vsyncadd [#allocation3], %s28
      %s31 = sshll.u32 [#allocation2], 4
      %s32 = int_to_ptr.vmem [resolvable:$true] %s31
      %34 = dma.hbm_to_vmem [thread:$0]  %s0, 128, %s32, [#allocation3]
    $region5: #{tpu_custom_call.1} parent=1 // pred_fallthru
      _
    // Predicated region
    $region6: #{tpu_custom_call.1} parent=1 // pred_check
      _
    $region7: #{tpu_custom_call.1} parent=1 // pred_check_branch
      %36 = sbr.rel (0) target = $region9
    $region8: #{tpu_custom_call.1} parent=1 // pred_region
      %s38 = ssub.s32 128, 128
      %39 = vsyncadd [#allocation6], %s38
      %s41 = sshll.u32 [#allocation5], 4
      %s42 = int_to_ptr.vmem [resolvable:$true] %s41
      %44 = dma.hbm_to_vmem [thread:$0]  %s1, 128, %s42, [#allocation6]
    $region9: #{tpu_custom_call.1} parent=1 // pred_fallthru
      _
    // Predicated region
    $region10: #{tpu_custom_call.1} parent=1 // pred_check
      _
    $region11: #{tpu_custom_call.1} parent=1 // pred_check_branch
      %46 = sbr.rel (0) target = $region13
    $region12: #{tpu_custom_call.1} parent=1 // pred_region
      _
    $region13: #{tpu_custom_call.1} parent=1 // pred_fallthru
      _
    // Predicated region
    $region14: #{tpu_custom_call.1} parent=1 // pred_check
      _
    $region15: #{tpu_custom_call.1} parent=1 // pred_check_branch
      %48 = sbr.rel (0) target = $region17
    $region16: #{tpu_custom_call.1} parent=1 // pred_region
      %s50 = ssub.s32 128, 128
      %51 = vsyncadd [#allocation6], %s50
      %s53 = sshll.u32 [#allocation7], 4
      %s54 = int_to_ptr.vmem [resolvable:$true] %s53
      %56 = dma.hbm_to_vmem [thread:$0]  %s3, 128, %s54, [#allocation6]
    $region17: #{tpu_custom_call.1} parent=1 // pred_fallthru
      _
    // Predicated region
    $region18: #{tpu_custom_call.1} parent=1 // pred_check
      _
    $region19: #{tpu_custom_call.1} parent=1 // pred_check_branch
      %58 = sbr.rel (0) target = $region21
    $region20: #{tpu_custom_call.1} parent=1 // pred_region
      %s60 = ssub.s32 16, 16
      %61 = vsyncadd [#allocation9], %s60
      %s63 = sshll.u32 [#allocation8], 4
      %s64 = int_to_ptr.vmem [resolvable:$true] %s63
      %66 = dma.hbm_to_vmem [thread:$0]  %s4, 16, %s64, [#allocation9]
    $region21: #{tpu_custom_call.1} parent=1 // pred_fallthru
      _
    // Predicated region
    $region22: #{tpu_custom_call.1} parent=1 // pred_check
      _
    $region23: #{tpu_custom_call.1} parent=1 // pred_check_branch
      %68 = sbr.rel (0) target = $region25
    $region24: #{tpu_custom_call.1} parent=1 // pred_region
      _
    $region25: #{tpu_custom_call.1} parent=1 // pred_fallthru
      _
    // Predicated region
    $region26: #{tpu_custom_call.1} parent=1 // pred_check
      _
    $region27: #{tpu_custom_call.1} parent=1 // pred_check_branch
      %70 = sbr.rel (0) target = $region29
    $region28: #{tpu_custom_call.1} parent=1 // pred_region
      %s72 = ssub.s32 16, 16
      %73 = vsyncadd [#allocation9], %s72
      %s75 = sshll.u32 [#allocation10], 4
      %s76 = int_to_ptr.vmem [resolvable:$true] %s75
      %78 = dma.hbm_to_vmem [thread:$0]  %s6, 16, %s76, [#allocation9]
    $region29: #{tpu_custom_call.1} parent=1 // pred_fallthru
      _
    // Predicated region
    $region30: #{tpu_custom_call.1} parent=1 // pred_check
      _
    $region31: #{tpu_custom_call.1} parent=1 // pred_check_branch
      %80 = sbr.rel (0) target = $region33
    $region32: #{tpu_custom_call.1} parent=1 // pred_region
      _
    $region33: #{tpu_custom_call.1} parent=1 // pred_fallthru
      _
    // Predicated region
    $region34: #{tpu_custom_call.1} parent=1 // pred_check
      _
    $region35: #{tpu_custom_call.1} parent=1 // pred_check_branch
      %82 = sbr.rel (0) target = $region37
    $region36: #{tpu_custom_call.1} parent=1 // pred_region
      _
    $region37: #{tpu_custom_call.1} parent=1 // pred_fallthru
      _
    // Predicated region
    $region38: #{tpu_custom_call.1} parent=1 // pred_check
      _
    $region39: #{tpu_custom_call.1} parent=1 // pred_check_branch
      %84 = sbr.rel (0) target = $region41
    $region40: #{tpu_custom_call.1} parent=1 // pred_region
      %s86 = ssub.s32 16, 16
      %87 = vsyncadd [#allocation12], %s86
      %s89 = sshll.u32 [#allocation11], 4
      %s90 = int_to_ptr.vmem [resolvable:$true] %s89
      %92 = dma.hbm_to_vmem [thread:$0]  %s9, 16, %s90, [#allocation12]
    $region41: #{tpu_custom_call.1} parent=1 // pred_fallthru
      _
    // Predicated region
    $region42: #{tpu_custom_call.1} parent=1 // pred_check
      _
    $region43: #{tpu_custom_call.1} parent=1 // pred_check_branch
      %94 = sbr.rel (0) target = $region45
    $region44: #{tpu_custom_call.1} parent=1 // pred_region
      _
    $region45: #{tpu_custom_call.1} parent=1 // pred_fallthru
      _
    // Predicated region
    $region46: #{tpu_custom_call.1} parent=1 // pred_check
      _
    $region47: #{tpu_custom_call.1} parent=1 // pred_check_branch
      %96 = sbr.rel (0) target = $region49
    $region48: #{tpu_custom_call.1} parent=1 // pred_region
      _
    $region49: #{tpu_custom_call.1} parent=1 // pred_fallthru
      _
    // Predicated region
    $region50: #{tpu_custom_call.1} parent=1 // pred_check
      _
    $region51: #{tpu_custom_call.1} parent=1 // pred_check_branch
      %98 = sbr.rel (0) target = $region53
    $region52: #{tpu_custom_call.1} parent=1 // pred_region
      _
    $region53: #{tpu_custom_call.1} parent=1 // pred_fallthru
      _
    // Predicated region
    $region54: #{tpu_custom_call.1} parent=1 // pred_check
      _
    $region55: #{tpu_custom_call.1} parent=1 // pred_check_branch
      %100 = sbr.rel (0) target = $region57
    $region56: #{tpu_custom_call.1} parent=1 // pred_region
      %101 = dma.done [#allocation3], 128
    $region57: #{tpu_custom_call.1} parent=1 // pred_fallthru
      _
    // Predicated region
    $region58: #{tpu_custom_call.1} parent=1 // pred_check
      _
    $region59: #{tpu_custom_call.1} parent=1 // pred_check_branch
      %103 = sbr.rel (0) target = $region61
    $region60: #{tpu_custom_call.1} parent=1 // pred_region
      %104 = dma.done [#allocation6], 128
    $region61: #{tpu_custom_call.1} parent=1 // pred_fallthru
      _
    // Predicated region
    $region62: #{tpu_custom_call.1} parent=1 // pred_check
      _
    $region63: #{tpu_custom_call.1} parent=1 // pred_check_branch
      %106 = sbr.rel (0) target = $region65
    $region64: #{tpu_custom_call.1} parent=1 // pred_region
      %107 = dma.done [#allocation6], 128
    $region65: #{tpu_custom_call.1} parent=1 // pred_fallthru
      _
    // Predicated region
    $region66: #{tpu_custom_call.1} parent=1 // pred_check
      _
    $region67: #{tpu_custom_call.1} parent=1 // pred_check_branch
      %109 = sbr.rel (0) target = $region69
    $region68: #{tpu_custom_call.1} parent=1 // pred_region
      %110 = dma.done [#allocation9], 16
    $region69: #{tpu_custom_call.1} parent=1 // pred_fallthru
      _
    // Predicated region
    $region70: #{tpu_custom_call.1} parent=1 // pred_check
      _
    $region71: #{tpu_custom_call.1} parent=1 // pred_check_branch
      %112 = sbr.rel (0) target = $region73
    $region72: #{tpu_custom_call.1} parent=1 // pred_region
      %113 = dma.done [#allocation9], 16
    $region73: #{tpu_custom_call.1} parent=1 // pred_fallthru
      _
    // Predicated region
    $region74: #{tpu_custom_call.1} parent=1 // pred_check
      _
    $region75: #{tpu_custom_call.1} parent=1 // pred_check_branch
      %115 = sbr.rel (0) target = $region77
    $region76: #{tpu_custom_call.1} parent=1 // pred_region
      %116 = dma.done [#allocation12], 16
    $region77: #{tpu_custom_call.1} parent=1 // pred_fallthru
      _
    %v117 = vld [vmem:[#allocation2] sm:$0xff]
    %v118 = vld [vmem:[#allocation5] sm:$0xff]
    %v119 = vld [vmem:[%s2] sm:$0xff]
    %v120 = vld [vmem:[%s2 + $0x8] sm:$0xff]
    %v121 = vld [vmem:[#allocation7] sm:$0xff]
    %v122 = vld [vmem:[#allocation8] sm:$0x1]
    %v124 = vlaneseq
    %v125 = vshrl.u32 %v124, 7
    %v126 = vsub.s32 0, %v125
    %v127 = vrot.slane %v122, %v126
    %vm129 = vcmask 64512
    %v131 = vsel %vm129, %v117, 0
    %133 = vmatprep.subr.mxu0 0.0
    %134 = vmatpush1.msra.mxu0 0.0
    %135 = vmatprep.subr.mxu0 0.0
    %136 = vmatpush1.msra.mxu0 0.0
    %137 = vmatprep.subr.mxu0 0.0
    %138 = vmatpush1.msra.mxu0 0.0
    %139 = vmatprep.subr.mxu0 0.0
    %140 = vmatpush1.msra.mxu0 0.0
    %141 = vmatprep.subr.mxu0 0.0
    %142 = vmatpush1.msra.mxu0 0.0
    %143 = vmatprep.subr.mxu0 0.0
    %144 = vmatpush1.msra.mxu0 0.0
    %145 = vmatprep.subr.mxu0 0.0
    %146 = vmatpush1.msra.mxu0 0.0
    %147 = vmatprep.subr.mxu0 0.0
    %148 = vmatpush1.msra.mxu0 0.0
    %149 = vmatprep.subr.mxu0 0.0
    %150 = vmatpush1.msra.mxu0 0.0
    %151 = vmatprep.subr.mxu0 0.0
    %152 = vmatpush1.msra.mxu0 0.0
    %153 = vmatprep.subr.mxu0 0.0
    %154 = vmatpush1.msra.mxu0 0.0
    %155 = vmatprep.subr.mxu0 0.0
    %156 = vmatpush1.msra.mxu0 0.0
    %157 = vmatprep.subr.mxu0 0.0
    %158 = vmatpush1.msra.mxu0 0.0
    %159 = vmatprep.subr.mxu0 0.0
    %160 = vmatpush1.msra.mxu0 0.0
    %161 = vmatprep.subr.mxu0 0.0
    %162 = vmatpush1.msra.mxu0 0.0
    %163 = vmatprep.subr.mxu0 0.0
    %164 = vmatpush1.msra.mxu0 %v121
    %165 = vmatprep.subr.mxu0 0.0
    %166 = vmatpush2.msra.mxu0 0.0
    %167 = vmatprep.subr.mxu0 0.0
    %168 = vmatpush2.msra.mxu0 0.0
    %169 = vmatprep.subr.mxu0 0.0
    %170 = vmatpush2.msra.mxu0 0.0
    %171 = vmatprep.subr.mxu0 0.0
    %172 = vmatpush2.msra.mxu0 0.0
    %173 = vmatprep.subr.mxu0 0.0
    %174 = vmatpush2.msra.mxu0 0.0
    %175 = vmatprep.subr.mxu0 0.0
    %176 = vmatpush2.msra.mxu0 0.0
    %177 = vmatprep.subr.mxu0 0.0
    %178 = vmatpush2.msra.mxu0 0.0
    %179 = vmatprep.subr.mxu0 0.0
    %180 = vmatpush2.msra.mxu0 0.0
    %181 = vmatprep.subr.mxu0 0.0
    %182 = vmatpush2.msra.mxu0 0.0
    %183 = vmatprep.subr.mxu0 0.0
    %184 = vmatpush2.msra.mxu0 0.0
    %185 = vmatprep.subr.mxu0 0.0
    %186 = vmatpush2.msra.mxu0 0.0
    %187 = vmatprep.subr.mxu0 0.0
    %188 = vmatpush2.msra.mxu0 0.0
    %189 = vmatprep.subr.mxu0 0.0
    %190 = vmatpush2.msra.mxu0 0.0
    %191 = vmatprep.subr.mxu0 0.0
    %192 = vmatpush2.msra.mxu0 0.0
    %193 = vmatprep.subr.mxu0 0.0
    %194 = vmatpush2.msra.mxu0 0.0
    %195 = vmatprep.subr.mxu0 0.0
    %196 = vmatpush2.msra.mxu0 0.0
    %197 = vmatprep.mubr.f32.mxu0 0.0
    %198 = vmatmul.mubr.f32.gmra.mxu0 %v131
    %v199 = vpop.f32.mrf.mxu0
    %v200 = vadd.f32 %v127, %v199
    %v201 = vpop.f32.mrf.mxu0
    %202 = vdwg.mxu0
    %v203 = vsub.f32 0.0, %v200
    %v204 = vmul.f32 %v203, 1.442695
    %v205 = vpow.pop %v204
    %v206 = vadd.f32 %v205, 1.0
    %v207 = vrcp.pop %v206
    %v208 = vmul.f32 %v200, %v207
    %v209 = vld [vmem:[%s5] sm:$0xff]
    %v210 = vld [vmem:[%s5 + $0x8] sm:$0xff]
    %v211 = vld [vmem:[%s5 + $0x10] sm:$0xff]
    %v212 = vld [vmem:[%s5 + $0x18] sm:$0xff]
    %v213 = vld [vmem:[%s5 + $0x20] sm:$0xff]
    %v214 = vld [vmem:[%s5 + $0x28] sm:$0xff]
    %v215 = vld [vmem:[%s5 + $0x30] sm:$0xff]
    %v216 = vld [vmem:[%s5 + $0x38] sm:$0xff]
    %v217 = vld [vmem:[%s5 + $0x40] sm:$0xff]
    %v218 = vld [vmem:[%s5 + $0x48] sm:$0xff]
    %v219 = vld [vmem:[%s5 + $0x50] sm:$0xff]
    %v220 = vld [vmem:[%s5 + $0x58] sm:$0xff]
    %v221 = vld [vmem:[%s5 + $0x60] sm:$0xff]
    %v222 = vld [vmem:[%s5 + $0x68] sm:$0xff]
    %v223 = vld [vmem:[%s5 + $0x70] sm:$0xff]
    %v224 = vld [vmem:[%s5 + $0x78] sm:$0xff]
    %v225 = vld [vmem:[%s5 + $0x80] sm:$0xff]
    %v226 = vld [vmem:[%s5 + $0x88] sm:$0xff]
    %v227 = vld [vmem:[%s5 + $0x90] sm:$0xff]
    %v228 = vld [vmem:[%s5 + $0x98] sm:$0xff]
    %vm229 = vcmask 261120
    %v231 = vsel %vm229, %v118, 0
    %233 = vmatprep.subr.mxu0 0.0
    %234 = vmatpush1.msra.mxu0 0.0
    %235 = vmatprep.subr.mxu0 0.0
    %236 = vmatpush1.msra.mxu0 0.0
    %237 = vmatprep.subr.mxu0 0.0
    %238 = vmatpush1.msra.mxu0 0.0
    %239 = vmatprep.subr.mxu0 0.0
    %240 = vmatpush1.msra.mxu0 0.0
    %241 = vmatprep.subr.mxu0 0.0
    %242 = vmatpush1.msra.mxu0 0.0
    %243 = vmatprep.subr.mxu0 0.0
    %244 = vmatpush1.msra.mxu0 0.0
    %245 = vmatprep.subr.mxu0 0.0
    %246 = vmatpush1.msra.mxu0 0.0
    %247 = vmatprep.subr.mxu0 0.0
    %248 = vmatpush1.msra.mxu0 0.0
    %249 = vmatprep.subr.mxu0 0.0
    %250 = vmatpush1.msra.mxu0 0.0
    %251 = vmatprep.subr.mxu0 0.0
    %252 = vmatpush1.msra.mxu0 0.0
    %253 = vmatprep.subr.mxu0 0.0
    %254 = vmatpush1.msra.mxu0 0.0
    %255 = vmatprep.subr.mxu0 0.0
    %256 = vmatpush1.msra.mxu0 0.0
    %257 = vmatprep.subr.mxu0 %v225
    %258 = vmatpush1.msra.mxu0 %v224
    %259 = vmatprep.subr.mxu0 %v220
    %260 = vmatpush1.msra.mxu0 %v219
    %261 = vmatprep.subr.mxu0 %v215
    %262 = vmatpush1.msra.mxu0 %v214
    %263 = vmatprep.subr.mxu0 %v210
    %264 = vmatpush1.msra.mxu0 %v209
    %265 = vmatprep.subr.mxu0 0.0
    %266 = vmatpush2.msra.mxu0 0.0
    %267 = vmatprep.subr.mxu0 0.0
    %268 = vmatpush2.msra.mxu0 0.0
    %269 = vmatprep.subr.mxu0 0.0
    %270 = vmatpush2.msra.mxu0 0.0
    %271 = vmatprep.subr.mxu0 0.0
    %272 = vmatpush2.msra.mxu0 0.0
    %273 = vmatprep.subr.mxu0 0.0
    %274 = vmatpush2.msra.mxu0 0.0
    %275 = vmatprep.subr.mxu0 0.0
    %276 = vmatpush2.msra.mxu0 0.0
    %277 = vmatprep.subr.mxu0 0.0
    %278 = vmatpush2.msra.mxu0 0.0
    %279 = vmatprep.subr.mxu0 0.0
    %280 = vmatpush2.msra.mxu0 0.0
    %281 = vmatprep.subr.mxu0 0.0
    %282 = vmatpush2.msra.mxu0 0.0
    %283 = vmatprep.subr.mxu0 0.0
    %284 = vmatpush2.msra.mxu0 0.0
    %285 = vmatprep.subr.mxu0 0.0
    %286 = vmatpush2.msra.mxu0 0.0
    %287 = vmatprep.subr.mxu0 0.0
    %288 = vmatpush2.msra.mxu0 0.0
    %289 = vmatprep.subr.mxu0 0.0
    %290 = vmatpush2.msra.mxu0 0.0
    %291 = vmatprep.subr.mxu0 0.0
    %292 = vmatpush2.msra.mxu0 0.0
    %293 = vmatprep.subr.mxu0 0.0
    %294 = vmatpush2.msra.mxu0 0.0
    %295 = vmatprep.subr.mxu0 0.0
    %296 = vmatpush2.msra.mxu0 0.0
    %297 = vmatprep.mubr.f32.mxu0 0.0
    %298 = vmatmul.mubr.f32.gmra.mxu0 %v231
    %v299 = vpop.f32.mrf.mxu0
    %v300 = vadd.f32 0.0, %v299
    %v301 = vpop.f32.mrf.mxu0
    %v302 = vadd.f32 0.0, %v301
    %303 = vdwg.mxu0
    %304 = vmatprep.subr.mxu0 0.0
    %305 = vmatpush1.msra.mxu0 0.0
    %306 = vmatprep.subr.mxu0 0.0
    %307 = vmatpush1.msra.mxu0 0.0
    %308 = vmatprep.subr.mxu0 0.0
    %309 = vmatpush1.msra.mxu0 0.0
    %310 = vmatprep.subr.mxu0 0.0
    %311 = vmatpush1.msra.mxu0 0.0
    %312 = vmatprep.subr.mxu0 0.0
    %313 = vmatpush1.msra.mxu0 0.0
    %314 = vmatprep.subr.mxu0 0.0
    %315 = vmatpush1.msra.mxu0 0.0
    %316 = vmatprep.subr.mxu0 0.0
    %317 = vmatpush1.msra.mxu0 0.0
    %318 = vmatprep.subr.mxu0 0.0
    %319 = vmatpush1.msra.mxu0 0.0
    %320 = vmatprep.subr.mxu0 0.0
    %321 = vmatpush1.msra.mxu0 0.0
    %322 = vmatprep.subr.mxu0 0.0
    %323 = vmatpush1.msra.mxu0 0.0
    %324 = vmatprep.subr.mxu0 0.0
    %325 = vmatpush1.msra.mxu0 0.0
    %326 = vmatprep.subr.mxu0 0.0
    %327 = vmatpush1.msra.mxu0 0.0
    %328 = vmatprep.subr.mxu0 %v227
    %329 = vmatpush1.msra.mxu0 %v226
    %330 = vmatprep.subr.mxu0 %v222
    %331 = vmatpush1.msra.mxu0 %v221
    %332 = vmatprep.subr.mxu0 %v217
    %333 = vmatpush1.msra.mxu0 %v216
    %334 = vmatprep.subr.mxu0 %v212
    %335 = vmatpush1.msra.mxu0 %v211
    %336 = vmatprep.subr.mxu0 0.0
    %337 = vmatpush2.msra.mxu0 0.0
    %338 = vmatprep.subr.mxu0 0.0
    %339 = vmatpush2.msra.mxu0 0.0
    %340 = vmatprep.subr.mxu0 0.0
    %341 = vmatpush2.msra.mxu0 0.0
    %342 = vmatprep.subr.mxu0 0.0
    %343 = vmatpush2.msra.mxu0 0.0
    %344 = vmatprep.subr.mxu0 0.0
    %345 = vmatpush2.msra.mxu0 0.0
    %346 = vmatprep.subr.mxu0 0.0
    %347 = vmatpush2.msra.mxu0 0.0
    %348 = vmatprep.subr.mxu0 0.0
    %349 = vmatpush2.msra.mxu0 0.0
    %350 = vmatprep.subr.mxu0 0.0
    %351 = vmatpush2.msra.mxu0 0.0
    %352 = vmatprep.subr.mxu0 0.0
    %353 = vmatpush2.msra.mxu0 0.0
    %354 = vmatprep.subr.mxu0 0.0
    %355 = vmatpush2.msra.mxu0 0.0
    %356 = vmatprep.subr.mxu0 0.0
    %357 = vmatpush2.msra.mxu0 0.0
    %358 = vmatprep.subr.mxu0 0.0
    %359 = vmatpush2.msra.mxu0 0.0
    %360 = vmatprep.subr.mxu0 0.0
    %361 = vmatpush2.msra.mxu0 0.0
    %362 = vmatprep.subr.mxu0 0.0
    %363 = vmatpush2.msra.mxu0 0.0
    %364 = vmatprep.subr.mxu0 0.0
    %365 = vmatpush2.msra.mxu0 0.0
    %366 = vmatprep.subr.mxu0 0.0
    %367 = vmatpush2.msra.mxu0 0.0
    %368 = vmatprep.mubr.f32.mxu0 0.0
    %369 = vmatmul.mubr.f32.gmra.mxu0 %v231
    %v370 = vpop.f32.mrf.mxu0
    %v371 = vadd.f32 0.0, %v370
    %v372 = vpop.f32.mrf.mxu0
    %v373 = vadd.f32 0.0, %v372
    %374 = vdwg.mxu0
    %375 = vmatprep.subr.mxu0 0.0
    %376 = vmatpush1.msra.mxu0 0.0
    %377 = vmatprep.subr.mxu0 0.0
    %378 = vmatpush1.msra.mxu0 0.0
    %379 = vmatprep.subr.mxu0 0.0
    %380 = vmatpush1.msra.mxu0 0.0
    %381 = vmatprep.subr.mxu0 0.0
    %382 = vmatpush1.msra.mxu0 0.0
    %383 = vmatprep.subr.mxu0 0.0
    %384 = vmatpush1.msra.mxu0 0.0
    %385 = vmatprep.subr.mxu0 0.0
    %386 = vmatpush1.msra.mxu0 0.0
    %387 = vmatprep.subr.mxu0 0.0
    %388 = vmatpush1.msra.mxu0 0.0
    %389 = vmatprep.subr.mxu0 0.0
    %390 = vmatpush1.msra.mxu0 0.0
    %391 = vmatprep.subr.mxu0 0.0
    %392 = vmatpush1.msra.mxu0 0.0
    %393 = vmatprep.subr.mxu0 0.0
    %394 = vmatpush1.msra.mxu0 0.0
    %395 = vmatprep.subr.mxu0 0.0
    %396 = vmatpush1.msra.mxu0 0.0
    %397 = vmatprep.subr.mxu0 0.0
    %398 = vmatpush1.msra.mxu0 0.0
    %399 = vmatprep.subr.mxu0 0.0
    %400 = vmatpush1.msra.mxu0 %v228
    %401 = vmatprep.subr.mxu0 0.0
    %402 = vmatpush1.msra.mxu0 %v223
    %403 = vmatprep.subr.mxu0 0.0
    %404 = vmatpush1.msra.mxu0 %v218
    %405 = vmatprep.subr.mxu0 0.0
    %406 = vmatpush1.msra.mxu0 %v213
    %407 = vmatprep.subr.mxu0 0.0
    %408 = vmatpush2.msra.mxu0 0.0
    %409 = vmatprep.subr.mxu0 0.0
    %410 = vmatpush2.msra.mxu0 0.0
    %411 = vmatprep.subr.mxu0 0.0
    %412 = vmatpush2.msra.mxu0 0.0
    %413 = vmatprep.subr.mxu0 0.0
    %414 = vmatpush2.msra.mxu0 0.0
    %415 = vmatprep.subr.mxu0 0.0
    %416 = vmatpush2.msra.mxu0 0.0
    %417 = vmatprep.subr.mxu0 0.0
    %418 = vmatpush2.msra.mxu0 0.0
    %419 = vmatprep.subr.mxu0 0.0
    %420 = vmatpush2.msra.mxu0 0.0
    %421 = vmatprep.subr.mxu0 0.0
    %422 = vmatpush2.msra.mxu0 0.0
    %423 = vmatprep.subr.mxu0 0.0
    %424 = vmatpush2.msra.mxu0 0.0
    %425 = vmatprep.subr.mxu0 0.0
    %426 = vmatpush2.msra.mxu0 0.0
    %427 = vmatprep.subr.mxu0 0.0
    %428 = vmatpush2.msra.mxu0 0.0
    %429 = vmatprep.subr.mxu0 0.0
    %430 = vmatpush2.msra.mxu0 0.0
    %431 = vmatprep.subr.mxu0 0.0
    %432 = vmatpush2.msra.mxu0 0.0
    %433 = vmatprep.subr.mxu0 0.0
    %434 = vmatpush2.msra.mxu0 0.0
    %435 = vmatprep.subr.mxu0 0.0
    %436 = vmatpush2.msra.mxu0 0.0
    %437 = vmatprep.subr.mxu0 0.0
    %438 = vmatpush2.msra.mxu0 0.0
    %439 = vmatprep.mubr.f32.mxu0 0.0
    %440 = vmatmul.mubr.f32.gmra.mxu0 %v231
    %v441 = vpop.f32.mrf.mxu0
    %v442 = vadd.f32 0.0, %v441
    %v443 = vpop.f32.mrf.mxu0
    %444 = vdwg.mxu0
    %v445 = vld [vmem:[#allocation10] sm:$0x1]
    %v447 = vlaneseq
    %v448 = vshrl.u32 %v447, 7
    %v449 = vsub.s32 0, %v448
    %v450 = vrot.slane %v445, %v449
    %v452 = vadd.f32 %v442, %v450
    %v453 = vmax.f32 %v452, 0.0
    %v454 = vand.u32 2147483647, %v452
    %v455 = vsub.f32 0.0, %v454
    %v456 = vmul.f32 %v455, 1.442695
    %v457 = vpow.pop %v456
    %v458 = vadd.f32 %v457, 1.0
    %v459 = vlog2.pop %v458
    %v460 = vmul.f32 %v459, 0.6931472
    %v461 = vmul.f32 -0.5, %v457
    %v462 = vadd.f32 %v461, 1.0
    %v463 = vmul.f32 %v462, %v457
    %v464 = vand.u32 2147483647, %v457
    %vm465 = vcmp.lt.f32.partialorder %v464, 0.0004427343
    %v466 = vsel %vm465, %v463, %v460
    %v467 = vadd.f32 %v453, %v466
    %v468 = vmul.f32 %v467, %v208
    %v469 = vld [vmem:[#allocation11] sm:$0x1]
    %v471 = vlaneseq
    %v472 = vshrl.u32 %v471, 7
    %v473 = vsub.s32 0, %v472
    %v474 = vrot.slane %v469, %v473
    %v476 = vmul.f32 %v474, %v208
    %478 = vrot.lane.b32.xlu0 %v208, 96
    %v479 = vpop.permute.xlu0 %478
    %v481 = vmul.f32 %v476, %v479
    %v482 = vld [vmem:[%s7] sm:$0xff]
    %v483 = vld [vmem:[%s7 + $0x8] sm:$0xff]
    %v484 = vld [vmem:[%s7 + $0x10] sm:$0xff]
    %v485 = vld [vmem:[%s7 + $0x18] sm:$0xff]
    %v486 = vld [vmem:[%s7 + $0x20] sm:$0xff]
    %v487 = vld [vmem:[%s7 + $0x28] sm:$0xff]
    %v488 = vld [vmem:[%s7 + $0x30] sm:$0xff]
    %v489 = vld [vmem:[%s7 + $0x38] sm:$0xff]
    %v491 = vsel %vm229, %v467, 0
    %493 = vmatprep.subr.mxu0 0.0
    %494 = vmatpush1.msra.mxu0 0.0
    %495 = vmatprep.subr.mxu0 0.0
    %496 = vmatpush1.msra.mxu0 0.0
    %497 = vmatprep.subr.mxu0 0.0
    %498 = vmatpush1.msra.mxu0 0.0
    %499 = vmatprep.subr.mxu0 0.0
    %500 = vmatpush1.msra.mxu0 0.0
    %501 = vmatprep.subr.mxu0 0.0
    %502 = vmatpush1.msra.mxu0 0.0
    %503 = vmatprep.subr.mxu0 0.0
    %504 = vmatpush1.msra.mxu0 0.0
    %505 = vmatprep.subr.mxu0 0.0
    %506 = vmatpush1.msra.mxu0 0.0
    %507 = vmatprep.subr.mxu0 0.0
    %508 = vmatpush1.msra.mxu0 0.0
    %509 = vmatprep.subr.mxu0 0.0
    %510 = vmatpush1.msra.mxu0 0.0
    %511 = vmatprep.subr.mxu0 0.0
    %512 = vmatpush1.msra.mxu0 0.0
    %513 = vmatprep.subr.mxu0 0.0
    %514 = vmatpush1.msra.mxu0 0.0
    %515 = vmatprep.subr.mxu0 0.0
    %516 = vmatpush1.msra.mxu0 0.0
    %517 = vmatprep.subr.mxu0 %v489
    %518 = vmatpush1.msra.mxu0 %v488
    %519 = vmatprep.subr.mxu0 %v487
    %520 = vmatpush1.msra.mxu0 %v486
    %521 = vmatprep.subr.mxu0 %v485
    %522 = vmatpush1.msra.mxu0 %v484
    %523 = vmatprep.subr.mxu0 %v483
    %524 = vmatpush1.msra.mxu0 %v482
    %525 = vmatprep.subr.mxu0 0.0
    %526 = vmatpush2.msra.mxu0 0.0
    %527 = vmatprep.subr.mxu0 0.0
    %528 = vmatpush2.msra.mxu0 0.0
    %529 = vmatprep.subr.mxu0 0.0
    %530 = vmatpush2.msra.mxu0 0.0
    %531 = vmatprep.subr.mxu0 0.0
    %532 = vmatpush2.msra.mxu0 0.0
    %533 = vmatprep.subr.mxu0 0.0
    %534 = vmatpush2.msra.mxu0 0.0
    %535 = vmatprep.subr.mxu0 0.0
    %536 = vmatpush2.msra.mxu0 0.0
    %537 = vmatprep.subr.mxu0 0.0
    %538 = vmatpush2.msra.mxu0 0.0
    %539 = vmatprep.subr.mxu0 0.0
    %540 = vmatpush2.msra.mxu0 0.0
    %541 = vmatprep.subr.mxu0 0.0
    %542 = vmatpush2.msra.mxu0 0.0
    %543 = vmatprep.subr.mxu0 0.0
    %544 = vmatpush2.msra.mxu0 0.0
    %545 = vmatprep.subr.mxu0 0.0
    %546 = vmatpush2.msra.mxu0 0.0
    %547 = vmatprep.subr.mxu0 0.0
    %548 = vmatpush2.msra.mxu0 0.0
    %549 = vmatprep.subr.mxu0 0.0
    %550 = vmatpush2.msra.mxu0 0.0
    %551 = vmatprep.subr.mxu0 0.0
    %552 = vmatpush2.msra.mxu0 0.0
    %553 = vmatprep.subr.mxu0 0.0
    %554 = vmatpush2.msra.mxu0 0.0
    %555 = vmatprep.subr.mxu0 0.0
    %556 = vmatpush2.msra.mxu0 0.0
    %557 = vmatprep.mubr.f32.mxu0 0.0
    %558 = vmatmul.mubr.f32.gmra.mxu0 %v491
    %v559 = vpop.f32.mrf.mxu0
    %v560 = vadd.f32 0.0, %v559
    %v561 = vpop.f32.mrf.mxu0
    %v562 = vadd.f32 0.0, %v561
    %563 = vdwg.mxu0
    %v564 = vmul.f32 %v560, 1.442695
    %v565 = vpow.pop %v564
    %v566 = vmul.f32 %v562, 1.442695
    %v567 = vpow.pop %v566
    %v568 = vld [vmem:[%s8] sm:$0xff]
    %v569 = vld [vmem:[%s8 + $0x8] sm:$0xff]
    %v570 = vld [vmem:[%s8 + $0x10] sm:$0xff]
    %v571 = vld [vmem:[%s8 + $0x18] sm:$0xff]
    %v572 = vld [vmem:[%s8 + $0x20] sm:$0xff]
    %v573 = vld [vmem:[%s8 + $0x28] sm:$0xff]
    %v574 = vld [vmem:[%s8 + $0x30] sm:$0xff]
    %v575 = vld [vmem:[%s8 + $0x38] sm:$0xff]
    %v577 = vsel %vm229, %v468, 0
    %579 = vmatprep.subr.mxu0 0.0
    %580 = vmatpush1.msra.mxu0 0.0
    %581 = vmatprep.subr.mxu0 0.0
    %582 = vmatpush1.msra.mxu0 0.0
    %583 = vmatprep.subr.mxu0 0.0
    %584 = vmatpush1.msra.mxu0 0.0
    %585 = vmatprep.subr.mxu0 0.0
    %586 = vmatpush1.msra.mxu0 0.0
    %587 = vmatprep.subr.mxu0 0.0
    %588 = vmatpush1.msra.mxu0 0.0
    %589 = vmatprep.subr.mxu0 0.0
    %590 = vmatpush1.msra.mxu0 0.0
    %591 = vmatprep.subr.mxu0 0.0
    %592 = vmatpush1.msra.mxu0 0.0
    %593 = vmatprep.subr.mxu0 0.0
    %594 = vmatpush1.msra.mxu0 0.0
    %595 = vmatprep.subr.mxu0 0.0
    %596 = vmatpush1.msra.mxu0 0.0
    %597 = vmatprep.subr.mxu0 0.0
    %598 = vmatpush1.msra.mxu0 0.0
    %599 = vmatprep.subr.mxu0 0.0
    %600 = vmatpush1.msra.mxu0 0.0
    %601 = vmatprep.subr.mxu0 0.0
    %602 = vmatpush1.msra.mxu0 0.0
    %603 = vmatprep.subr.mxu0 %v575
    %604 = vmatpush1.msra.mxu0 %v574
    %605 = vmatprep.subr.mxu0 %v573
    %606 = vmatpush1.msra.mxu0 %v572
    %607 = vmatprep.subr.mxu0 %v571
    %608 = vmatpush1.msra.mxu0 %v570
    %609 = vmatprep.subr.mxu0 %v569
    %610 = vmatpush1.msra.mxu0 %v568
    %611 = vmatprep.subr.mxu0 0.0
    %612 = vmatpush2.msra.mxu0 0.0
    %613 = vmatprep.subr.mxu0 0.0
    %614 = vmatpush2.msra.mxu0 0.0
    %615 = vmatprep.subr.mxu0 0.0
    %616 = vmatpush2.msra.mxu0 0.0
    %617 = vmatprep.subr.mxu0 0.0
    %618 = vmatpush2.msra.mxu0 0.0
    %619 = vmatprep.subr.mxu0 0.0
    %620 = vmatpush2.msra.mxu0 0.0
    %621 = vmatprep.subr.mxu0 0.0
    %622 = vmatpush2.msra.mxu0 0.0
    %623 = vmatprep.subr.mxu0 0.0
    %624 = vmatpush2.msra.mxu0 0.0
    %625 = vmatprep.subr.mxu0 0.0
    %626 = vmatpush2.msra.mxu0 0.0
    %627 = vmatprep.subr.mxu0 0.0
    %628 = vmatpush2.msra.mxu0 0.0
    %629 = vmatprep.subr.mxu0 0.0
    %630 = vmatpush2.msra.mxu0 0.0
    %631 = vmatprep.subr.mxu0 0.0
    %632 = vmatpush2.msra.mxu0 0.0
    %633 = vmatprep.subr.mxu0 0.0
    %634 = vmatpush2.msra.mxu0 0.0
    %635 = vmatprep.subr.mxu0 0.0
    %636 = vmatpush2.msra.mxu0 0.0
    %637 = vmatprep.subr.mxu0 0.0
    %638 = vmatpush2.msra.mxu0 0.0
    %639 = vmatprep.subr.mxu0 0.0
    %640 = vmatpush2.msra.mxu0 0.0
    %641 = vmatprep.subr.mxu0 0.0
    %642 = vmatpush2.msra.mxu0 0.0
    %643 = vmatprep.mubr.f32.mxu0 0.0
    %644 = vmatmul.mubr.f32.gmra.mxu0 %v577
    %v645 = vpop.f32.mrf.mxu0
    %v646 = vadd.f32 0.0, %v645
    %v647 = vpop.f32.mrf.mxu0
    %v648 = vadd.f32 0.0, %v647
    %649 = vdwg.mxu0
    %v650 = vsel %vm229, %v479, 0
    %652 = vmatprep.subr.mxu0 0.0
    %653 = vmatpush1.msra.mxu0 0.0
    %654 = vmatprep.subr.mxu0 0.0
    %655 = vmatpush1.msra.mxu0 0.0
    %656 = vmatprep.subr.mxu0 0.0
    %657 = vmatpush1.msra.mxu0 0.0
    %658 = vmatprep.subr.mxu0 0.0
    %659 = vmatpush1.msra.mxu0 0.0
    %660 = vmatprep.subr.mxu0 0.0
    %661 = vmatpush1.msra.mxu0 0.0
    %662 = vmatprep.subr.mxu0 0.0
    %663 = vmatpush1.msra.mxu0 0.0
    %664 = vmatprep.subr.mxu0 0.0
    %665 = vmatpush1.msra.mxu0 0.0
    %666 = vmatprep.subr.mxu0 0.0
    %667 = vmatpush1.msra.mxu0 0.0
    %668 = vmatprep.subr.mxu0 0.0
    %669 = vmatpush1.msra.mxu0 0.0
    %670 = vmatprep.subr.mxu0 0.0
    %671 = vmatpush1.msra.mxu0 0.0
    %672 = vmatprep.subr.mxu0 0.0
    %673 = vmatpush1.msra.mxu0 0.0
    %674 = vmatprep.subr.mxu0 0.0
    %675 = vmatpush1.msra.mxu0 0.0
    %676 = vmatprep.subr.mxu0 %v575
    %677 = vmatpush1.msra.mxu0 %v574
    %678 = vmatprep.subr.mxu0 %v573
    %679 = vmatpush1.msra.mxu0 %v572
    %680 = vmatprep.subr.mxu0 %v571
    %681 = vmatpush1.msra.mxu0 %v570
    %682 = vmatprep.subr.mxu0 %v569
    %683 = vmatpush1.msra.mxu0 %v568
    %684 = vmatprep.subr.mxu0 0.0
    %685 = vmatpush2.msra.mxu0 0.0
    %686 = vmatprep.subr.mxu0 0.0
    %687 = vmatpush2.msra.mxu0 0.0
    %688 = vmatprep.subr.mxu0 0.0
    %689 = vmatpush2.msra.mxu0 0.0
    %690 = vmatprep.subr.mxu0 0.0
    %691 = vmatpush2.msra.mxu0 0.0
    %692 = vmatprep.subr.mxu0 0.0
    %693 = vmatpush2.msra.mxu0 0.0
    %694 = vmatprep.subr.mxu0 0.0
    %695 = vmatpush2.msra.mxu0 0.0
    %696 = vmatprep.subr.mxu0 0.0
    %697 = vmatpush2.msra.mxu0 0.0
    %698 = vmatprep.subr.mxu0 0.0
    %699 = vmatpush2.msra.mxu0 0.0
    %700 = vmatprep.subr.mxu0 0.0
    %701 = vmatpush2.msra.mxu0 0.0
    %702 = vmatprep.subr.mxu0 0.0
    %703 = vmatpush2.msra.mxu0 0.0
    %704 = vmatprep.subr.mxu0 0.0
    %705 = vmatpush2.msra.mxu0 0.0
    %706 = vmatprep.subr.mxu0 0.0
    %707 = vmatpush2.msra.mxu0 0.0
    %708 = vmatprep.subr.mxu0 0.0
    %709 = vmatpush2.msra.mxu0 0.0
    %710 = vmatprep.subr.mxu0 0.0
    %711 = vmatpush2.msra.mxu0 0.0
    %712 = vmatprep.subr.mxu0 0.0
    %713 = vmatpush2.msra.mxu0 0.0
    %714 = vmatprep.subr.mxu0 0.0
    %715 = vmatpush2.msra.mxu0 0.0
    %716 = vmatprep.mubr.f32.mxu0 0.0
    %717 = vmatmul.mubr.f32.gmra.mxu0 %v650
    %v718 = vpop.f32.mrf.mxu0
    %v719 = vadd.f32 0.0, %v718
    %v720 = vpop.f32.mrf.mxu0
    %v721 = vadd.f32 0.0, %v720
    %722 = vdwg.mxu0
    %v723 = vmul.f32 %v119, %v565
    %v724 = vmul.f32 %v120, %v567
    %v725 = vmul.f32 %v646, %v300
    %v726 = vmul.f32 %v648, %v302
    %v727 = vadd.f32 %v723, %v725
    %v728 = vadd.f32 %v724, %v726
    %729 = vst [vmem:[#allocation13] sm:$0xff] %v727
    %730 = vst [vmem:[#allocation13 + $0x8] sm:$0xff] %v728
    %v731 = vmul.f32 %v727, %v371
    %v732 = vmul.f32 %v728, %v373
    %v733 = vmul.f32 %v731, %v719
    %v734 = vmul.f32 %v732, %v721
    %v735 = vld [vmem:[%s10] sm:$0xff]
    %v736 = vld [vmem:[%s10 + $0x8] sm:$0xff]
    %v737 = vld [vmem:[%s10 + $0x10] sm:$0xff]
    %v738 = vld [vmem:[%s10 + $0x18] sm:$0xff]
    %v739 = vld [vmem:[%s10 + $0x20] sm:$0xff]
    %v740 = vld [vmem:[%s10 + $0x28] sm:$0xff]
    %v741 = vld [vmem:[%s10 + $0x30] sm:$0xff]
    %v742 = vld [vmem:[%s10 + $0x38] sm:$0xff]
    %v743 = vld [vmem:[%s10 + $0x40] sm:$0xff]
    %v744 = vld [vmem:[%s10 + $0x48] sm:$0xff]
    %v745 = vld [vmem:[%s10 + $0x50] sm:$0xff]
    %v746 = vld [vmem:[%s10 + $0x58] sm:$0xff]
    %v747 = vld [vmem:[%s10 + $0x60] sm:$0xff]
    %v748 = vld [vmem:[%s10 + $0x68] sm:$0xff]
    %v749 = vld [vmem:[%s10 + $0x70] sm:$0xff]
    %v750 = vld [vmem:[%s10 + $0x78] sm:$0xff]
    %v751 = vld [vmem:[%s10 + $0x80] sm:$0xff]
    %v752 = vld [vmem:[%s10 + $0x88] sm:$0xff]
    %v753 = vld [vmem:[%s10 + $0x90] sm:$0xff]
    %v754 = vld [vmem:[%s10 + $0x98] sm:$0xff]
    %v755 = vld [vmem:[%s10 + $0xa0] sm:$0xff]
    %v756 = vld [vmem:[%s10 + $0xa8] sm:$0xff]
    %v757 = vld [vmem:[%s10 + $0xb0] sm:$0xff]
    %v758 = vld [vmem:[%s10 + $0xb8] sm:$0xff]
    %v759 = vld [vmem:[%s10 + $0xc0] sm:$0xff]
    %v760 = vld [vmem:[%s10 + $0xc8] sm:$0xff]
    %v761 = vld [vmem:[%s10 + $0xd0] sm:$0xff]
    %v762 = vld [vmem:[%s10 + $0xd8] sm:$0xff]
    %v763 = vld [vmem:[%s10 + $0xe0] sm:$0xff]
    %v764 = vld [vmem:[%s10 + $0xe8] sm:$0xff]
    %v765 = vld [vmem:[%s10 + $0xf0] sm:$0xff]
    %v766 = vld [vmem:[%s10 + $0xf8] sm:$0xff]
    %v767 = vld [vmem:[%s11] sm:$0xff]
    %v768 = vld [vmem:[%s11 + $0x8] sm:$0xff]
    %v769 = vld [vmem:[%s11 + $0x10] sm:$0xff]
    %v770 = vld [vmem:[%s11 + $0x18] sm:$0xff]
    %v772 = vsel %vm229, %v481, 0
    %774 = vmatprep.subr.mxu0 0.0
    %775 = vmatpush1.msra.mxu0 0.0
    %776 = vmatprep.subr.mxu0 0.0
    %777 = vmatpush1.msra.mxu0 0.0
    %778 = vmatprep.subr.mxu0 0.0
    %779 = vmatpush1.msra.mxu0 0.0
    %780 = vmatprep.subr.mxu0 0.0
    %781 = vmatpush1.msra.mxu0 0.0
    %782 = vmatprep.subr.mxu0 0.0
    %783 = vmatpush1.msra.mxu0 0.0
    %784 = vmatprep.subr.mxu0 0.0
    %785 = vmatpush1.msra.mxu0 0.0
    %786 = vmatprep.subr.mxu0 0.0
    %787 = vmatpush1.msra.mxu0 0.0
    %788 = vmatprep.subr.mxu0 0.0
    %789 = vmatpush1.msra.mxu0 0.0
    %790 = vmatprep.subr.mxu0 0.0
    %791 = vmatpush1.msra.mxu0 0.0
    %792 = vmatprep.subr.mxu0 0.0
    %793 = vmatpush1.msra.mxu0 0.0
    %794 = vmatprep.subr.mxu0 0.0
    %795 = vmatpush1.msra.mxu0 0.0
    %796 = vmatprep.subr.mxu0 0.0
    %797 = vmatpush1.msra.mxu0 0.0
    %798 = vmatprep.subr.mxu0 0.0
    %799 = vmatpush1.msra.mxu0 %v770
    %800 = vmatprep.subr.mxu0 0.0
    %801 = vmatpush1.msra.mxu0 %v769
    %802 = vmatprep.subr.mxu0 0.0
    %803 = vmatpush1.msra.mxu0 %v768
    %804 = vmatprep.subr.mxu0 0.0
    %805 = vmatpush1.msra.mxu0 %v767
    %806 = vmatprep.subr.mxu0 0.0
    %807 = vmatpush2.msra.mxu0 0.0
    %808 = vmatprep.subr.mxu0 0.0
    %809 = vmatpush2.msra.mxu0 0.0
    %810 = vmatprep.subr.mxu0 0.0
    %811 = vmatpush2.msra.mxu0 0.0
    %812 = vmatprep.subr.mxu0 0.0
    %813 = vmatpush2.msra.mxu0 0.0
    %814 = vmatprep.subr.mxu0 0.0
    %815 = vmatpush2.msra.mxu0 0.0
    %816 = vmatprep.subr.mxu0 0.0
    %817 = vmatpush2.msra.mxu0 0.0
    %818 = vmatprep.subr.mxu0 0.0
    %819 = vmatpush2.msra.mxu0 0.0
    %820 = vmatprep.subr.mxu0 0.0
    %821 = vmatpush2.msra.mxu0 0.0
    %822 = vmatprep.subr.mxu0 0.0
    %823 = vmatpush2.msra.mxu0 0.0
    %824 = vmatprep.subr.mxu0 0.0
    %825 = vmatpush2.msra.mxu0 0.0
    %826 = vmatprep.subr.mxu0 0.0
    %827 = vmatpush2.msra.mxu0 0.0
    %828 = vmatprep.subr.mxu0 0.0
    %829 = vmatpush2.msra.mxu0 0.0
    %830 = vmatprep.subr.mxu0 0.0
    %831 = vmatpush2.msra.mxu0 0.0
    %832 = vmatprep.subr.mxu0 0.0
    %833 = vmatpush2.msra.mxu0 0.0
    %834 = vmatprep.subr.mxu0 0.0
    %835 = vmatpush2.msra.mxu0 0.0
    %836 = vmatprep.subr.mxu0 0.0
    %837 = vmatpush2.msra.mxu0 0.0
    %838 = vmatprep.mubr.f32.mxu0 0.0
    %839 = vmatmul.mubr.f32.gmra.mxu0 %v772
    %v840 = vpop.f32.mrf.mxu0
    %v841 = vadd.f32 0.0, %v840
    %v842 = vpop.f32.mrf.mxu0
    %843 = vdwg.mxu0
    %844 = vmatprep.subr.mxu0 0.0
    %845 = vmatpush1.msra.mxu0 %v750
    %846 = vmatprep.subr.mxu0 0.0
    %847 = vmatpush1.msra.mxu0 %v749
    %848 = vmatprep.subr.mxu0 0.0
    %849 = vmatpush1.msra.mxu0 %v748
    %850 = vmatprep.subr.mxu0 0.0
    %851 = vmatpush1.msra.mxu0 %v747
    %852 = vmatprep.subr.mxu0 0.0
    %853 = vmatpush1.msra.mxu0 %v746
    %854 = vmatprep.subr.mxu0 0.0
    %855 = vmatpush1.msra.mxu0 %v745
    %856 = vmatprep.subr.mxu0 0.0
    %857 = vmatpush1.msra.mxu0 %v744
    %858 = vmatprep.subr.mxu0 0.0
    %859 = vmatpush1.msra.mxu0 %v743
    %860 = vmatprep.subr.mxu0 0.0
    %861 = vmatpush1.msra.mxu0 %v742
    %862 = vmatprep.subr.mxu0 0.0
    %863 = vmatpush1.msra.mxu0 %v741
    %864 = vmatprep.subr.mxu0 0.0
    %865 = vmatpush1.msra.mxu0 %v740
    %866 = vmatprep.subr.mxu0 0.0
    %867 = vmatpush1.msra.mxu0 %v739
    %868 = vmatprep.subr.mxu0 0.0
    %869 = vmatpush1.msra.mxu0 %v738
    %870 = vmatprep.subr.mxu0 0.0
    %871 = vmatpush1.msra.mxu0 %v737
    %872 = vmatprep.subr.mxu0 0.0
    %873 = vmatpush1.msra.mxu0 %v736
    %874 = vmatprep.subr.mxu0 0.0
    %875 = vmatpush1.msra.mxu0 %v735
    %876 = vmatprep.subr.mxu0 0.0
    %877 = vmatpush2.msra.mxu0 %v766
    %878 = vmatprep.subr.mxu0 0.0
    %879 = vmatpush2.msra.mxu0 %v765
    %880 = vmatprep.subr.mxu0 0.0
    %881 = vmatpush2.msra.mxu0 %v764
    %882 = vmatprep.subr.mxu0 0.0
    %883 = vmatpush2.msra.mxu0 %v763
    %884 = vmatprep.subr.mxu0 0.0
    %885 = vmatpush2.msra.mxu0 %v762
    %886 = vmatprep.subr.mxu0 0.0
    %887 = vmatpush2.msra.mxu0 %v761
    %888 = vmatprep.subr.mxu0 0.0
    %889 = vmatpush2.msra.mxu0 %v760
    %890 = vmatprep.subr.mxu0 0.0
    %891 = vmatpush2.msra.mxu0 %v759
    %892 = vmatprep.subr.mxu0 0.0
    %893 = vmatpush2.msra.mxu0 %v758
    %894 = vmatprep.subr.mxu0 0.0
    %895 = vmatpush2.msra.mxu0 %v757
    %896 = vmatprep.subr.mxu0 0.0
    %897 = vmatpush2.msra.mxu0 %v756
    %898 = vmatprep.subr.mxu0 0.0
    %899 = vmatpush2.msra.mxu0 %v755
    %900 = vmatprep.subr.mxu0 0.0
    %901 = vmatpush2.msra.mxu0 %v754
    %902 = vmatprep.subr.mxu0 0.0
    %903 = vmatpush2.msra.mxu0 %v753
    %904 = vmatprep.subr.mxu0 0.0
    %905 = vmatpush2.msra.mxu0 %v752
    %906 = vmatprep.subr.mxu0 0.0
    %907 = vmatpush2.msra.mxu0 %v751
    %908 = vmatprep.mubr.f32.mxu0 %v734
    %909 = vmatmul.mubr.f32.gmra.mxu0 %v733
    %v910 = vpop.f32.mrf.mxu0
    %v911 = vadd.f32 %v841, %v910
    %v912 = vpop.f32.mrf.mxu0
    %913 = vdwg.mxu0
    %v914 = vld [vmem:[%s12] sm:$0x1]
    %v916 = vlaneseq
    %v917 = vshrl.u32 %v916, 7
    %v918 = vsub.s32 0, %v917
    %v919 = vrot.slane %v914, %v918
    %v921 = vadd.f32 %v911, %v919
    %vm922 = vcmask 31744
    %923 = vst.msk [vmem:[%s13] sm:$0xff] %vm922, %v921
    // Predicated region
    $region78: #{tpu_custom_call.1} parent=1 // pred_check
      _
    $region79: #{tpu_custom_call.1} parent=1 // pred_check_branch
      %925 = sbr.rel (0) target = $region81
    $region80: #{tpu_custom_call.1} parent=1 // pred_region
      _
    $region81: #{tpu_custom_call.1} parent=1 // pred_fallthru
      _
    // Predicated region
    $region82: #{tpu_custom_call.1} parent=1 // pred_check
      _
    $region83: #{tpu_custom_call.1} parent=1 // pred_check_branch
      %927 = sbr.rel (0) target = $region85
    $region84: #{tpu_custom_call.1} parent=1 // pred_region
      %s929 = ssub.s32 256, 256
      %930 = vsyncadd [#allocation4], %s929
      %s932 = sshll.u32 [#allocation13], 4
      %s933 = int_to_ptr.vmem [resolvable:$true] %s932
      %935 = dma.vmem_to_hbm [thread:$0]  %s933, 256, %s14, [#allocation4]
    $region85: #{tpu_custom_call.1} parent=1 // pred_fallthru
      _
    // Predicated region
    $region86: #{tpu_custom_call.1} parent=1 // pred_check
      _
    $region87: #{tpu_custom_call.1} parent=1 // pred_check_branch
      %937 = sbr.rel (0) target = $region89
    $region88: #{tpu_custom_call.1} parent=1 // pred_region
      _
    $region89: #{tpu_custom_call.1} parent=1 // pred_fallthru
      _
    // Predicated region
    $region90: #{tpu_custom_call.1} parent=1 // pred_check
      _
    $region91: #{tpu_custom_call.1} parent=1 // pred_check_branch
      %939 = sbr.rel (0) target = $region93
    $region92: #{tpu_custom_call.1} parent=1 // pred_region
      %940 = dma.done [#allocation4], 256
    $region93: #{tpu_custom_call.1} parent=1 // pred_fallthru
      _
    %941 = vsyncpa [#allocation3], 1
    %942 = vsyncpa [#allocation6], 1
    %943 = vsyncpa [#allocation9], 1
    %944 = vsyncpa [#allocation12], 1
    %945 = vsyncpa [#allocation4], 1

</llo_original>
